<compile_context>
chip_gen: v6e
topology: v6e:2x2x1
jax: 0.10.0
libtpu: 0.0.40
codegen_flags: <defaults>
</compile_context>

<pallas_src>
import functools
import math

import numpy as np
import jax
import jax.numpy as jnp
from jax.experimental import pallas as pl
from jax.experimental.pallas import tpu as pltpu


def _gdl_kernel(x_ref, l_ref, o_ref, inter_acc, sump_acc, *,
                smooth, use_multiclass, C, W, S_tile, n_limbs, inv_c, sum_t_const):
    # x_ref:     (1, C, S_tile) f32 logits for one batch element, one spatial tile
    # l_ref:     (1, H, W)      int32 labels for the same batch element (H == C)
    # o_ref:     (1, 8, 128)    f32 per-batch-element loss (lane-dense block)
    # inter_acc: (C, 1) f32 scratch   sump_acc: (C, 1) f32 scratch
    s = pl.program_id(1)
    num_s = pl.num_programs(1)
    Wt = S_tile // C  # label columns covered by one spatial tile

    @pl.when(s == 0)
    def _init():
        inter_acc[...] = jnp.zeros_like(inter_acc)
        sump_acc[...] = jnp.zeros_like(sump_acc)

    x = x_ref[0]                                    # (C, S_tile)
    if use_multiclass:
        m = jnp.max(x, axis=0, keepdims=True)
        e = jnp.exp(x - m)
        p = e * pl.reciprocal(jnp.sum(e, axis=0, keepdims=True), approx=False)
    else:
        p = pl.reciprocal(1.0 + jnp.exp(-x), approx=False)   # sigmoid

    # ---- build the quirky-flattened one-hot mask for this tile, in-register ----
    # t_view[h, j] = (labels[h, j // C] == j % C),  j = s*S_tile + jj (local jj).
    # Expansion matrix E[a, jj] = 1 iff label column a == j // C (exactly one 1 per column).
    a_idx = jax.lax.broadcasted_iota(jnp.int32, (W, S_tile), 0)
    j_idx = jax.lax.broadcasted_iota(jnp.int32, (W, S_tile), 1)
    rel = j_idx - (a_idx - s * Wt) * C
    E = jnp.where((rel >= 0) & (rel < C), 1.0, 0.0).astype(jnp.float32)

    # g[h, a] = labels[h, a] + C*a encodes (column, label); after expansion the mask
    # is simply (g_rep == j).  The matmul is split into <=8-bit limbs so every MXU
    # product/accumulate is exact whatever precision the f32 matmul lowers to.
    lbl = l_ref[0]                                            # (C, W) int32 (H == C)
    col = jax.lax.broadcasted_iota(jnp.int32, (C, W), 1)
    g_int = lbl + C * col
    g_rep = jnp.zeros((C, S_tile), jnp.float32)
    scale = 1.0
    for _ in range(n_limbs):
        limb = (g_int & 255).astype(jnp.float32)
        g_rep = g_rep + scale * jnp.dot(limb, E, preferred_element_type=jnp.float32)
        g_int = g_int >> 8
        scale = scale * 256.0

    j_glob = (jax.lax.broadcasted_iota(jnp.int32, (C, S_tile), 1)
              + s * S_tile).astype(jnp.float32)
    mask = g_rep == j_glob                                    # (C, S_tile) bool one-hot

    # masked sum instead of convert(one_hot)->f32 then multiply
    inter_acc[...] += jnp.sum(jnp.where(mask, p, 0.0), axis=1, keepdims=True)
    sump_acc[...] += jnp.sum(p, axis=1, keepdims=True)

    @pl.when(s == num_s - 1)
    def _finalize():
        # each one-hot row of the (H, W*C) view sums to exactly W (labels in [0, C),
        # which F.one_hot requires), so sum_t is the constant W.
        dice = (2.0 * inter_acc[...] + smooth) * pl.reciprocal(
            sump_acc[...] + sum_t_const + smooth, approx=False)        # (C, 1)
        loss = 1.0 - jnp.sum(dice, axis=0, keepdims=True) * inv_c       # (1, 1)
        o_ref[0] = jnp.broadcast_to(loss, o_ref.shape[1:])


def _pick_s_tile(S, C, W, max_block_bytes=1 << 20):
    """Largest spatial tile that divides S, is lcm(C,128)-aligned (or == S) and fits budget."""
    def ok(t):
        return S % t == 0 and t % C == 0 and (t % 128 == 0 or t == S)

    def bytes_for(t):
        # f32 x block + f32 expansion matrix (dominant in-kernel temporaries)
        return (C + W) * t * 4

    if ok(S) and bytes_for(S) <= max_block_bytes:
        return S
    step = (C * 128) // math.gcd(C, 128)   # lcm(C, 128)
    best = None
    t = step
    while t <= S:
        if ok(t) and bytes_for(t) <= max_block_bytes:
            best = t
        t += step
    return best if best is not None else S


def generalized_dice_loss(inputs, targets, smooth=1.0, use_multiclass=True,
                          s_tile=None):
    """Pallas-backed equivalent of GeneralizedDiceLoss().forward(inputs, targets, smooth)."""
    N, C, H, W = inputs.shape
    assert C == H, "reference torch code only runs when num_classes == H (see .view() quirk)"
    S = H * W
    assert S < (1 << 24), "flattened spatial extent must stay f32-exact"
    assert targets.shape == (N, H, W)

    St = _pick_s_tile(S, C, W) if s_tile is None else int(s_tile)
    assert S % St == 0 and St % C == 0 and (St % 128 == 0 or St == S), \
        f"bad spatial tile {St} for S={S}, C={C}"
    num_s = S // St
    n_limbs = 1 if S <= 256 else (2 if S <= 65536 else 3)

    # wrapper-side glue mirroring torch's .view(): flatten logits to (N, C, S)
    x = inputs.reshape(N, C, S).astype(jnp.float32)
    t = targets.astype(jnp.int32)   # raw labels only -- no one-hot round-trip in HBM

    kernel = functools.partial(
        _gdl_kernel,
        smooth=float(smooth),
        use_multiclass=bool(use_multiclass),
        C=C, W=W, S_tile=St, n_limbs=n_limbs,
        inv_c=1.0 / float(C),
        sum_t_const=float(W),
    )

    # explicit scoped-VMEM limit: double-buffered blocks + generous temporaries,
    # capped well below v7x's 64 MiB physical VMEM.
    x_blk = C * St * 4
    lbl_blk = H * W * 4
    out_blk = 8 * 128 * 4
    est = 2 * (x_blk + lbl_blk + out_blk) + (8 * C + 3 * W) * St * 4 + (1 << 20)
    vmem_limit = int(min(48 << 20, max(16 << 20, est)))

    per_elem = pl.pallas_call(
        kernel,
        out_shape=jax.ShapeDtypeStruct((N, 8, 128), jnp.float32),
        grid_spec=pltpu.PrefetchScalarGridSpec(
            num_scalar_prefetch=0,
            grid=(N, num_s),
            in_specs=[
                # logits: spatially tiled, one batch element per step
                pl.BlockSpec((1, C, St), lambda b, s: (b, 0, s)),
                # labels: full (tiny) block per batch element; block index is constant
                # in s so it is DMA'd only once per batch element
                pl.BlockSpec((1, H, W), lambda b, s: (b, 0, 0)),
            ],
            out_specs=pl.BlockSpec((1, 8, 128), lambda b, s: (b, 0, 0)),
            scratch_shapes=[pltpu.VMEM((C, 1), jnp.float32),
                            pltpu.VMEM((C, 1), jnp.float32)],
        ),
        compiler_params=pltpu.CompilerParams(
            dimension_semantics=("parallel", "arbitrary"),
            vmem_limit_bytes=vmem_limit,
        ),
    )(x, t)

    # final mean over the batch: tiny, plain JAX
    return jnp.mean(per_elem[:, 0, 0])


def _reference_jax(inputs, targets, smooth=1.0, use_multiclass=True):
    # Pure-JAX transcription of the torch forward, for verification only.
    N, C, H, W = inputs.shape
    p = jax.nn.softmax(inputs, axis=1) if use_multiclass else jax.nn.sigmoid(inputs)
    p = p.reshape(N, C, H * W)
    t = jax.nn.one_hot(targets, C, dtype=jnp.float32).reshape(N, H, W * C)
    inter = jnp.sum(p * t, axis=2)
    dice = (2.0 * inter + smooth) / (jnp.sum(p, axis=2) + jnp.sum(t, axis=2) + smooth)
    return jnp.mean(1.0 - jnp.mean(dice, axis=1))


if __name__ == "__main__":
    key = jax.random.PRNGKey(0)
    k1, k2 = jax.random.split(key)

    N, C, H, W = 2, 16, 16, 16  # C == H required by the original code's flattening
    inputs = jax.random.normal(k1, (N, C, H, W), dtype=jnp.float32)
    targets = jax.random.randint(k2, (N, H, W), 0, C, dtype=jnp.int32)

    # default tiling (single spatial step per batch element; grid = (2, 1))
    ref = jax.block_until_ready(_reference_jax(inputs, targets, 1.0, True))
    out = jax.block_until_ready(generalized_dice_loss(inputs, targets, 1.0, True))
    np.testing.assert_allclose(np.asarray(out), np.asarray(ref), rtol=1e-5, atol=1e-6)

    # forced spatial tiling exercises the multi-step accumulator path (grid = (2, 2))
    out_tiled = jax.block_until_ready(
        generalized_dice_loss(inputs, targets, 1.0, True, s_tile=128))
    np.testing.assert_allclose(np.asarray(out_tiled), np.asarray(ref), rtol=1e-5, atol=1e-6)

    # sigmoid (use_multiclass=False) path
    ref_sig = jax.block_until_ready(_reference_jax(inputs, targets, 1.0, False))
    out_sig = jax.block_until_ready(generalized_dice_loss(inputs, targets, 1.0, False))
    np.testing.assert_allclose(np.asarray(out_sig), np.asarray(ref_sig), rtol=1e-5, atol=1e-6)

    print("KERNEL_OK")
</pallas_src>

<mosaic_0001>
module attributes {stable_mosaic.version = 11 : i64} {
  func.func @_gdl_kernel(%arg0: i32, %arg1: i32, %arg2: memref<1x16x256xf32, #tpu.memory_space<vmem>>, %arg3: memref<1x16x16xi32, #tpu.memory_space<vmem>>, %arg4: memref<1x8x128xf32, #tpu.memory_space<vmem>>, %arg5: memref<16x1xf32, #tpu.memory_space<vmem>>, %arg6: memref<16x1xf32, #tpu.memory_space<vmem>>) attributes {dimension_semantics = [#tpu.dimension_semantics<parallel>, #tpu.dimension_semantics<arbitrary>], iteration_bounds = array<i64: 2, 1>, scalar_prefetch = 0 : i64, scratch_operands = 2 : i64, tpu.core_type = #tpu.core_type<tc>, window_params = [{transform_indices = @transform_0, window_bounds = array<i64: 1, 16, 256>}, {transform_indices = @transform_1, window_bounds = array<i64: 1, 16, 16>}, {transform_indices = @transform_2, window_bounds = array<i64: 1, 8, 128>}]} {
    %c0_i32 = arith.constant 0 : i32
    %0 = arith.cmpi eq, %arg1, %c0_i32 : i32
    %1 = arith.extui %0 : i1 to i32
    %c0_i32_0 = arith.constant 0 : i32
    %2 = arith.cmpi ne, %1, %c0_i32_0 : i32
    scf.if %2 {
      %cst_29 = arith.constant 0.000000e+00 : f32
      %66 = vector.broadcast %cst_29 : f32 to vector<16x1xf32>
      %c0_30 = arith.constant 0 : index
      %c0_31 = arith.constant 0 : index
      %67 = vector.load %arg5[%c0_30, %c0_31] : memref<16x1xf32, #tpu.memory_space<vmem>>, vector<16x1xf32>
      tpu.vector_store %arg5[%c0_30, %c0_31], %66 {strides = array<i32>} : memref<16x1xf32, #tpu.memory_space<vmem>>, vector<16x1xf32>,
      %cst_32 = arith.constant 0.000000e+00 : f32
      %68 = vector.broadcast %cst_32 : f32 to vector<16x1xf32>
      %c0_33 = arith.constant 0 : index
      %c0_34 = arith.constant 0 : index
      %69 = vector.load %arg6[%c0_33, %c0_34] : memref<16x1xf32, #tpu.memory_space<vmem>>, vector<16x1xf32>
      tpu.vector_store %arg6[%c0_33, %c0_34], %68 {strides = array<i32>} : memref<16x1xf32, #tpu.memory_space<vmem>>, vector<16x1xf32>,
    } else {
    }
    %c0 = arith.constant 0 : index
    %c0_1 = arith.constant 0 : index
    %c0_2 = arith.constant 0 : index
    %3 = vector.load %arg2[%c0, %c0_1, %c0_2] : memref<1x16x256xf32, #tpu.memory_space<vmem>>, vector<1x16x256xf32>
    %4 = vector.shape_cast %3 : vector<1x16x256xf32> to vector<16x256xf32>
    %cst = arith.constant dense<0xFF800000> : vector<256xf32>
    %5 = vector.multi_reduction <maximumf>, %4, %cst [0] : vector<16x256xf32> to vector<256xf32>
    %6 = vector.shape_cast %5 : vector<256xf32> to vector<1x256xf32>
    %7 = vector.broadcast %6 : vector<1x256xf32> to vector<16x256xf32>
    %8 = arith.subf %4, %7 : vector<16x256xf32>
    %9 = math.exp %8 : vector<16x256xf32>
    %cst_3 = arith.constant dense<0.000000e+00> : vector<256xf32>
    %10 = vector.multi_reduction <add>, %9, %cst_3 [0] : vector<16x256xf32> to vector<256xf32>
    %11 = vector.shape_cast %10 : vector<256xf32> to vector<1x256xf32>
    %12 = tpu.reciprocal %11 : vector<1x256xf32> -> vector<1x256xf32>
    %13 = vector.broadcast %12 : vector<1x256xf32> to vector<16x256xf32>
    %14 = arith.mulf %9, %13 : vector<16x256xf32>
    %15 = tpu.iota {dimensions = array<i32: 0>} : vector<16x256xi32>
    %16 = tpu.iota {dimensions = array<i32: 1>} : vector<16x256xi32>
    %c16_i32 = arith.constant 16 : i32
    %17 = arith.muli %arg1, %c16_i32 : i32
    %18 = vector.broadcast %17 : i32 to vector<16x256xi32>
    %19 = arith.subi %15, %18 : vector<16x256xi32>
    %c16_i32_4 = arith.constant 16 : i32
    %20 = vector.broadcast %c16_i32_4 : i32 to vector<16x256xi32>
    %21 = arith.muli %19, %20 : vector<16x256xi32>
    %22 = arith.subi %16, %21 : vector<16x256xi32>
    %c0_i32_5 = arith.constant 0 : i32
    %23 = vector.broadcast %c0_i32_5 : i32 to vector<16x256xi32>
    %24 = arith.cmpi sge, %22, %23 : vector<16x256xi32>
    %c16_i32_6 = arith.constant 16 : i32
    %25 = vector.broadcast %c16_i32_6 : i32 to vector<16x256xi32>
    %26 = arith.cmpi slt, %22, %25 : vector<16x256xi32>
    %27 = arith.andi %24, %26 : vector<16x256xi1>
    %cst_7 = arith.constant 1.000000e+00 : f32
    %cst_8 = arith.constant 0.000000e+00 : f32
    %28 = vector.broadcast %cst_7 : f32 to vector<16x256xf32>
    %29 = vector.broadcast %cst_8 : f32 to vector<16x256xf32>
    %30 = arith.select %27, %28, %29 : vector<16x256xi1>, vector<16x256xf32>
    %c0_9 = arith.constant 0 : index
    %c0_10 = arith.constant 0 : index
    %c0_11 = arith.constant 0 : index
    %31 = vector.load %arg3[%c0_9, %c0_10, %c0_11] : memref<1x16x16xi32, #tpu.memory_space<vmem>>, vector<1x16x16xi32>
    %32 = vector.shape_cast %31 : vector<1x16x16xi32> to vector<16x16xi32>
    %33 = tpu.iota {dimensions = array<i32: 1>} : vector<16x16xi32>
    %c16_i32_12 = arith.constant 16 : i32
    %34 = vector.broadcast %c16_i32_12 : i32 to vector<16x16xi32>
    %35 = arith.muli %34, %33 : vector<16x16xi32>
    %36 = arith.addi %32, %35 : vector<16x16xi32>
    %cst_13 = arith.constant 0.000000e+00 : f32
    %37 = vector.broadcast %cst_13 : f32 to vector<16x256xf32>
    %c255_i32 = arith.constant 255 : i32
    %38 = vector.broadcast %c255_i32 : i32 to vector<16x16xi32>
    %39 = arith.andi %36, %38 : vector<16x16xi32>
    %40 = arith.sitofp %39 : vector<16x16xi32> to vector<16x16xf32>
    %cst_14 = arith.constant dense<0.000000e+00> : vector<16x256xf32>
    %41 = tpu.matmul %40, %30, %cst_14 {dimension_numbers = #tpu.dot_dimension_numbers<[1], [0], [0], [1], [0, 0, 1, 1], [], []>} : vector<16x16xf32>, vector<16x256xf32>, vector<16x256xf32> -> vector<16x256xf32>
    %cst_15 = arith.constant 1.000000e+00 : f32
    %42 = vector.broadcast %cst_15 : f32 to vector<16x256xf32>
    %43 = arith.mulf %42, %41 : vector<16x256xf32>
    %44 = arith.addf %37, %43 : vector<16x256xf32>
    %45 = tpu.iota {dimensions = array<i32: 1>} : vector<16x256xi32>
    %c256_i32 = arith.constant 256 : i32
    %46 = arith.muli %arg1, %c256_i32 : i32
    %47 = vector.broadcast %46 : i32 to vector<16x256xi32>
    %48 = arith.addi %45, %47 : vector<16x256xi32>
    %49 = arith.sitofp %48 : vector<16x256xi32> to vector<16x256xf32>
    %50 = arith.cmpf oeq, %44, %49 : vector<16x256xf32>
    %c0_16 = arith.constant 0 : index
    %c0_17 = arith.constant 0 : index
    %51 = vector.load %arg5[%c0_16, %c0_17] : memref<16x1xf32, #tpu.memory_space<vmem>>, vector<16x1xf32>
    %cst_18 = arith.constant 0.000000e+00 : f32
    %52 = vector.broadcast %cst_18 : f32 to vector<16x256xf32>
    %53 = arith.select %50, %14, %52 : vector<16x256xi1>, vector<16x256xf32>
    %cst_19 = arith.constant dense<0.000000e+00> : vector<16xf32>
    %54 = vector.multi_reduction <add>, %53, %cst_19 [1] : vector<16x256xf32> to vector<16xf32>
    %55 = vector.shape_cast %54 : vector<16xf32> to vector<16x1xf32>
    %56 = arith.addf %51, %55 : vector<16x1xf32>
    %c0_20 = arith.constant 0 : index
    %c0_21 = arith.constant 0 : index
    %57 = vector.load %arg5[%c0_20, %c0_21] : memref<16x1xf32, #tpu.memory_space<vmem>>, vector<16x1xf32>
    tpu.vector_store %arg5[%c0_20, %c0_21], %56 {strides = array<i32>} : memref<16x1xf32, #tpu.memory_space<vmem>>, vector<16x1xf32>,
    %c0_22 = arith.constant 0 : index
    %c0_23 = arith.constant 0 : index
    %58 = vector.load %arg6[%c0_22, %c0_23] : memref<16x1xf32, #tpu.memory_space<vmem>>, vector<16x1xf32>
    %cst_24 = arith.constant dense<0.000000e+00> : vector<16xf32>
    %59 = vector.multi_reduction <add>, %14, %cst_24 [1] : vector<16x256xf32> to vector<16xf32>
    %60 = vector.shape_cast %59 : vector<16xf32> to vector<16x1xf32>
    %61 = arith.addf %58, %60 : vector<16x1xf32>
    %c0_25 = arith.constant 0 : index
    %c0_26 = arith.constant 0 : index
    %62 = vector.load %arg6[%c0_25, %c0_26] : memref<16x1xf32, #tpu.memory_space<vmem>>, vector<16x1xf32>
    tpu.vector_store %arg6[%c0_25, %c0_26], %61 {strides = array<i32>} : memref<16x1xf32, #tpu.memory_space<vmem>>, vector<16x1xf32>,
    %c0_i32_27 = arith.constant 0 : i32
    %63 = arith.cmpi eq, %arg1, %c0_i32_27 : i32
    %64 = arith.extui %63 : i1 to i32
    %c0_i32_28 = arith.constant 0 : i32
    %65 = arith.cmpi ne, %64, %c0_i32_28 : i32
    scf.if %65 {
      %c0_29 = arith.constant 0 : index
      %c0_30 = arith.constant 0 : index
      %66 = vector.load %arg5[%c0_29, %c0_30] : memref<16x1xf32, #tpu.memory_space<vmem>>, vector<16x1xf32>
      %cst_31 = arith.constant 2.000000e+00 : f32
      %67 = vector.broadcast %cst_31 : f32 to vector<16x1xf32>
      %68 = arith.mulf %67, %66 : vector<16x1xf32>
      %cst_32 = arith.constant 1.000000e+00 : f32
      %69 = vector.broadcast %cst_32 : f32 to vector<16x1xf32>
      %70 = arith.addf %68, %69 : vector<16x1xf32>
      %c0_33 = arith.constant 0 : index
      %c0_34 = arith.constant 0 : index
      %71 = vector.load %arg6[%c0_33, %c0_34] : memref<16x1xf32, #tpu.memory_space<vmem>>, vector<16x1xf32>
      %cst_35 = arith.constant 1.600000e+01 : f32
      %72 = vector.broadcast %cst_35 : f32 to vector<16x1xf32>
      %73 = arith.addf %71, %72 : vector<16x1xf32>
      %cst_36 = arith.constant 1.000000e+00 : f32
      %74 = vector.broadcast %cst_36 : f32 to vector<16x1xf32>
      %75 = arith.addf %73, %74 : vector<16x1xf32>
      %76 = tpu.reciprocal %75 : vector<16x1xf32> -> vector<16x1xf32>
      %77 = arith.mulf %70, %76 : vector<16x1xf32>
      %cst_37 = arith.constant dense<0.000000e+00> : vector<1xf32>
      %78 = vector.multi_reduction <add>, %77, %cst_37 [0] : vector<16x1xf32> to vector<1xf32>
      %79 = vector.shape_cast %78 : vector<1xf32> to vector<1x1xf32>
      %cst_38 = arith.constant 6.250000e-02 : f32
      %80 = vector.broadcast %cst_38 : f32 to vector<1x1xf32>
      %81 = arith.mulf %79, %80 : vector<1x1xf32>
      %cst_39 = arith.constant 1.000000e+00 : f32
      %82 = vector.broadcast %cst_39 : f32 to vector<1x1xf32>
      %83 = arith.subf %82, %81 : vector<1x1xf32>
      %84 = vector.shape_cast %83 : vector<1x1xf32> to vector<1x1xf32>
      %85 = vector.broadcast %84 : vector<1x1xf32> to vector<8x128xf32>
      %c0_40 = arith.constant 0 : index
      %c0_41 = arith.constant 0 : index
      %c0_42 = arith.constant 0 : index
      %86 = vector.load %arg4[%c0_40, %c0_41, %c0_42] : memref<1x8x128xf32, #tpu.memory_space<vmem>>, vector<1x8x128xf32>
      %87 = vector.shape_cast %86 : vector<1x8x128xf32> to vector<8x128xf32>
      %88 = vector.shape_cast %85 : vector<8x128xf32> to vector<1x8x128xf32>
      tpu.vector_store %arg4[%c0_40, %c0_41, %c0_42], %88 {strides = array<i32>} : memref<1x8x128xf32, #tpu.memory_space<vmem>>, vector<1x8x128xf32>,
    } else {
    }
    return
  }
  func.func @transform_0(%arg0: i32, %arg1: i32) -> (i32, i32, i32) {
    %c0_i32 = arith.constant 0 : i32
    %c0_i32_0 = arith.constant 0 : i32
    return %arg0, %c0_i32, %arg1 : i32, i32, i32
  }
  func.func @transform_1(%arg0: i32, %arg1: i32) -> (i32, i32, i32) {
    %c0_i32 = arith.constant 0 : i32
    %c0_i32_0 = arith.constant 0 : i32
    %c0_i32_1 = arith.constant 0 : i32
    return %arg0, %c0_i32, %c0_i32_0 : i32, i32, i32
  }
  func.func @transform_2(%arg0: i32, %arg1: i32) -> (i32, i32, i32) {
    %c0_i32 = arith.constant 0 : i32
    %c0_i32_0 = arith.constant 0 : i32
    %c0_i32_1 = arith.constant 0 : i32
    return %arg0, %c0_i32, %c0_i32_0 : i32, i32, i32
  }
}

</mosaic_0001>

<llo_original>
// kernel: tpu_custom_call.1
$region0: #{tpu_custom_call.1}
  #allocation0 [shape = 'u32[]', space=smem, size = 0x4, offset = 0x4, fixed_abs, tag = 'smem constant byte address 0x4 - core index']
  #allocation1 [shape = 'u32[144,128]{1,0:T(1,128)}', space=vmem, size = 0x12000, scoped, tag = 'internal scratch']
  #allocation2 [shape = 'f32[16,1]{1,0:T(8,128)}', space=vmem, size = 0x2000, scoped, tag = 'scratch operand']
  #allocation3 [shape = 'f32[16,1]{1,0:T(8,128)}', space=vmem, size = 0x2000, scoped, tag = 'scratch operand']
  %s0 = inlined_call_operand.hbm [shape: f32[2,16,256], index: 0, kind: input, shape index: {}]
  %s1 = inlined_call_operand.hbm [shape: s32[2,16,16], index: 1, kind: input, shape index: {}]
  %s2 = inlined_call_operand.hbm [shape: f32[2,8,128], index: 2, kind: output, shape index: {}]
  %s3 = sld [smem:[#allocation0]]
  $region57: #{tpu_custom_call.1} parent=0
    _
  %s5 = ssub.s32 1, %s3
  %s6 = scalar_select 0, %s5, %s3
  $region1: #{tpu_custom_call.1} parent=0
    #allocation4 [shape = 'u8[32768]{0}', space=vmem, size = 0x8000, scoped, tag = 'input window, operand 0']
    #allocation5 [shape = 's32[2]{0}', space=sflag, size = 0x8, scoped, tag = 'scoped memory for tpu_custom_call.1']
    #allocation6 [shape = 's32[2]{0}', space=sflag, size = 0x8, scoped, tag = 'scoped memory for tpu_custom_call.1']
    #allocation7 [shape = 'u8[16384]{0}', space=vmem, size = 0x4000, scoped, tag = 'input window, operand 1']
    #allocation8 [shape = 's32[2]{0}', space=sflag, size = 0x8, scoped, tag = 'scoped memory for tpu_custom_call.1']
    #allocation9 [shape = 'u8[8192]{0}', space=vmem, size = 0x2000, scoped, tag = 'output window, operand 0']
    %7 = vsyncpa [#allocation5], 0
    %s8 = scalar_lea.sflag [#allocation5], 1
    %9 = vsyncpa %s8, 0
    %10 = vsyncpa [#allocation8], 0
    %s11 = scalar_lea.sflag [#allocation8], 1
    %12 = vsyncpa %s11, 0
    %13 = vsyncpa [#allocation6], 0
    %s14 = scalar_lea.sflag [#allocation6], 1
    %15 = vsyncpa %s14, 0
    loop: start=0, step=1, limit=4
    $region2: #{tpu_custom_call.1} parent=1 // loop_pre_header
      _
    $region3: #{tpu_custom_call.1} parent=1 // loop_header
      %s17 = sphi 0, %s21
      %p18 = scmp.ge.s32.totalorder %s17, 4
      %s24 = sphi 0, %s36
      %s25 = sphi 0, %s32
      %s26 = sphi 0, %s24
      %s27 = sphi 0, %s25
      %s28 = sphi 0, %s26
      %s29 = sphi 0, %s27
      %s41 = sphi 0, %s43
      %s44 = sphi 0, %s41
      %s45 = sphi 0, %s44
      %s61 = sphi 0, %s45
      %s67 = sphi 0, %s69
      %s70 = sphi 0, %s67
      %s71 = sphi 0, %s70
      %s87 = sphi 0, %s71
      %s93 = sphi 0, %s95
      %s96 = sphi 0, %s93
      %s97 = sphi 0, %s96
      %s113 = sphi 0, %s97
    $region4: #{tpu_custom_call.1} parent=1 // loop_header_branch
      %20 = sbr.rel (%p18) target = $region8
    $region5: #{tpu_custom_call.1} parent=1 // loop_body
      %s22 = ssub.s32 %s17, 1
      %s23 = ssub.s32 %s17, 2
      %s30 = sadd.s32 1, %s25
      %p31 = scmp.ge.s32.totalorder %s30, 1
      %s32 = scalar_select %p31, 0, %s30
      %s33 = sadd.s32 1, %s24
      %s34 = scalar_select %p31, %s33, %s24
      %p35 = scmp.ge.s32.totalorder %s34, 2
      %s36 = scalar_select %p35, 0, %s34
      %s37 = ssub.s32 %s24, %s36
      %s38 = ssub.s32 %s25, %s32
      %s39 = sor.u32 %s37, %s38
      %p40 = scmp.eq.s32.totalorder %s39, 0
      %s42 = sadd.s32 %s41, 1
      %s43 = scalar_select %p40, %s41, %s42
      %p46 = pneg %p40
      %p47 = scmp.eq.s32.totalorder %s17, 1
      %p48 = por %p46, %p47
      %p49 = scmp.ne.s32.totalorder %s41, %s44
      %p50 = scmp.eq.s32.totalorder %s17, 0
      %p51 = por %p49, %p50
      %p52 = scmp.ne.s32.totalorder %s41, %s44
      %p53 = scmp.eq.s32.totalorder %s22, 1
      %p54 = por %p52, %p53
      %p55 = scmp.ne.s32.totalorder %s44, %s45
      %p56 = scmp.eq.s32.totalorder %s22, 0
      %p57 = por %p55, %p56
      %p58 = scmp.ne.s32.totalorder %s44, %s45
      %p59 = scmp.eq.s32.totalorder %s23, 1
      %p60 = por %p58, %p59
      %p62 = scmp.ne.s32.totalorder %s45, %s61
      %p63 = scmp.eq.s32.totalorder %s23, 0
      %p64 = por %p62, %p63
      %s65 = ssub.s32 %s24, %s36
      %p66 = scmp.eq.s32.totalorder %s65, 0
      %s68 = sadd.s32 %s67, 1
      %s69 = scalar_select %p66, %s67, %s68
      %p72 = pneg %p66
      %p73 = scmp.eq.s32.totalorder %s17, 1
      %p74 = por %p72, %p73
      %p75 = scmp.ne.s32.totalorder %s67, %s70
      %p76 = scmp.eq.s32.totalorder %s17, 0
      %p77 = por %p75, %p76
      %p78 = scmp.ne.s32.totalorder %s67, %s70
      %p79 = scmp.eq.s32.totalorder %s22, 1
      %p80 = por %p78, %p79
      %p81 = scmp.ne.s32.totalorder %s70, %s71
      %p82 = scmp.eq.s32.totalorder %s22, 0
      %p83 = por %p81, %p82
      %p84 = scmp.ne.s32.totalorder %s70, %s71
      %p85 = scmp.eq.s32.totalorder %s23, 1
      %p86 = por %p84, %p85
      %p88 = scmp.ne.s32.totalorder %s71, %s87
      %p89 = scmp.eq.s32.totalorder %s23, 0
      %p90 = por %p88, %p89
      %s91 = ssub.s32 %s24, %s36
      %p92 = scmp.eq.s32.totalorder %s91, 0
      %s94 = sadd.s32 %s93, 1
      %s95 = scalar_select %p92, %s93, %s94
      %p98 = pneg %p92
      %p99 = scmp.eq.s32.totalorder %s17, 1
      %p100 = por %p98, %p99
      %p101 = scmp.ne.s32.totalorder %s93, %s96
      %p102 = scmp.eq.s32.totalorder %s17, 0
      %p103 = por %p101, %p102
      %p104 = scmp.ne.s32.totalorder %s93, %s96
      %p105 = scmp.eq.s32.totalorder %s22, 1
      %p106 = por %p104, %p105
      %p107 = scmp.ne.s32.totalorder %s96, %s97
      %p108 = scmp.eq.s32.totalorder %s22, 0
      %p109 = por %p107, %p108
      %p110 = scmp.ne.s32.totalorder %s96, %s97
      %p111 = scmp.eq.s32.totalorder %s23, 1
      %p112 = por %p110, %p111
      %p114 = scmp.ne.s32.totalorder %s97, %s113
      %p115 = scmp.eq.s32.totalorder %s23, 0
      %p116 = por %p114, %p115
      %p117 = scmp.le.s32.totalorder 1, %s17
      %p118 = scmp.lt.s32.totalorder %s17, 3
      %p119 = pnand %p117, %p118
      %p120 = pneg %p119
      // Predicated region
      $region9: #{tpu_custom_call.1} parent=5 // pred_check
        _
      $region10: #{tpu_custom_call.1} parent=5 // pred_check_branch
        %122 = sbr.rel (%p119) target = $region12
      $region11: #{tpu_custom_call.1} parent=5 // pred_region
        %s123 = ssub.s32 %s17, 1
      $region12: #{tpu_custom_call.1} parent=5 // pred_fallthru
        _
      %p124 = scmp.lt.s32.totalorder %s17, 2
      // Predicated region
      $region13: #{tpu_custom_call.1} parent=5 // pred_check
        %p125 = pneg %p124
      $region14: #{tpu_custom_call.1} parent=5 // pred_check_branch
        %127 = sbr.rel (%p125) target = $region16
      $region15: #{tpu_custom_call.1} parent=5 // pred_region
        // Predicated region
        $region17: #{tpu_custom_call.1} parent=15 // pred_check
          %p128 = pneg %p51
        $region18: #{tpu_custom_call.1} parent=15 // pred_check_branch
          %130 = sbr.rel (%p128) target = $region20
        $region19: #{tpu_custom_call.1} parent=15 // pred_region
          %s131 = sand.u32 %s41, 1
          %s132 = scalar_lea.sflag [#allocation5], %s131
          %s133 = sand.u32 %s41, 1
          %s134 = smul.addr %s133, 32
          %s135 = scalar_lea.vmem [#allocation4], %s134
          %s136 = smul.u32 2, %s25
          %s138 = ssub.s32 512, 512
          %139 = vsyncadd %s132, %s138
          %s140 = smul.addr %s24, 4
          %s141 = sadd.s32 %s136, %s140
          %s142 = smul.addr %s141, 128
          %s143 = scalar_lea.hbm %s0, %s142
          %s144 = sshll.u32 %s135, 4
          %s145 = int_to_ptr.vmem [resolvable:$true] %s144
          %150 = dma.hbm_to_vmem [thread:$0]  %s143, 512, %s145, %s132, 256, 256, 16
        $region20: #{tpu_custom_call.1} parent=15 // pred_fallthru
          _
        // Predicated region
        $region21: #{tpu_custom_call.1} parent=15 // pred_check
          %p151 = pneg %p77
        $region22: #{tpu_custom_call.1} parent=15 // pred_check_branch
          %153 = sbr.rel (%p151) target = $region24
        $region23: #{tpu_custom_call.1} parent=15 // pred_region
          %s154 = sand.u32 %s67, 1
          %s155 = scalar_lea.sflag [#allocation8], %s154
          %s156 = sand.u32 %s67, 1
          %s157 = smul.addr %s156, 16
          %s158 = scalar_lea.vmem [#allocation7], %s157
          %s160 = ssub.s32 256, 256
          %161 = vsyncadd %s155, %s160
          %s162 = smul.addr %s24, 2
          %s163 = smul.addr %s162, 128
          %s164 = scalar_lea.hbm %s1, %s163
          %s165 = sshll.u32 %s158, 4
          %s166 = int_to_ptr.vmem [resolvable:$true] %s165
          %171 = dma.hbm_to_vmem [thread:$0]  %s164, 256, %s166, %s155, 128, 128, 8
        $region24: #{tpu_custom_call.1} parent=15 // pred_fallthru
          _
      $region16: #{tpu_custom_call.1} parent=5 // pred_fallthru
        _
      %p172 = scmp.le.s32.totalorder 1, %s17
      %p173 = scmp.lt.s32.totalorder %s17, 3
      %p174 = pnand %p172, %p173
      %p175 = pneg %p174
      // Predicated region
      $region25: #{tpu_custom_call.1} parent=5 // pred_check
        _
      $region26: #{tpu_custom_call.1} parent=5 // pred_check_branch
        %177 = sbr.rel (%p174) target = $region28
      $region27: #{tpu_custom_call.1} parent=5 // pred_region
        %s178 = ssub.s32 %s17, 1
        %s179 = sand.u32 %s44, 1
        %s180 = scalar_lea.sflag [#allocation5], %s179
        %s181 = sand.u32 %s44, 1
        %s182 = smul.addr %s181, 32
        %s183 = scalar_lea.vmem [#allocation4], %s182
        // Predicated region
        $region29: #{tpu_custom_call.1} parent=27 // pred_check
          %p184 = pneg %p57
        $region30: #{tpu_custom_call.1} parent=27 // pred_check_branch
          %186 = sbr.rel (%p184) target = $region32
        $region31: #{tpu_custom_call.1} parent=27 // pred_region
          %187 = dma.done %s180, 512
        $region32: #{tpu_custom_call.1} parent=27 // pred_fallthru
          _
        %s188 = sand.u32 %s70, 1
        %s189 = scalar_lea.sflag [#allocation8], %s188
        %s190 = sand.u32 %s70, 1
        %s191 = smul.addr %s190, 16
        %s192 = scalar_lea.vmem [#allocation7], %s191
        // Predicated region
        $region33: #{tpu_custom_call.1} parent=27 // pred_check
          %p193 = pneg %p83
        $region34: #{tpu_custom_call.1} parent=27 // pred_check_branch
          %195 = sbr.rel (%p193) target = $region36
        $region35: #{tpu_custom_call.1} parent=27 // pred_region
          %196 = dma.done %s189, 256
        $region36: #{tpu_custom_call.1} parent=27 // pred_fallthru
          _
        %s197 = sand.u32 %s44, 1
        %s198 = scalar_lea.sflag [#allocation5], %s197
        %s199 = sand.u32 %s44, 1
        %s200 = smul.addr %s199, 32
        %s201 = scalar_lea.vmem [#allocation4], %s200
        %p202 = pneg %p57
        %p203 = pneg %p54
        %s204 = sand.u32 %s70, 1
        %s205 = scalar_lea.sflag [#allocation8], %s204
        %s206 = sand.u32 %s70, 1
        %s207 = smul.addr %s206, 16
        %s208 = scalar_lea.vmem [#allocation7], %s207
        %p209 = pneg %p83
        %p210 = pneg %p80
        %p211 = pneg %p109
        %p212 = pneg %p106
        %s213 = sand.u32 %s96, 1
        %s214 = scalar_lea.sflag [#allocation6], %s213
        %s215 = sand.u32 %s96, 1
        %s216 = smul.addr %s215, 8
        %s217 = scalar_lea.vmem [#allocation9], %s216
        %s218 = smul.u32 2, %s27
        %p219 = scmp.eq.s32.totalorder %s27, 0
        // Predicated region
        $region37: #{tpu_custom_call.1} parent=27 // pred_check
          %p220 = pneg %p219
        $region38: #{tpu_custom_call.1} parent=27 // pred_check_branch
          %222 = sbr.rel (%p220) target = $region40
        $region39: #{tpu_custom_call.1} parent=27 // pred_region
          %vm223 = vcmask 7168
          %224 = vst.msk [vmem:[#allocation2] sm:$0xff] %vm223, 0.0
          %225 = vst.msk [vmem:[#allocation2 + $0x8] sm:$0xff] %vm223, 0.0
          %226 = vst.msk [vmem:[#allocation3] sm:$0xff] %vm223, 0.0
          %227 = vst.msk [vmem:[#allocation3 + $0x8] sm:$0xff] %vm223, 0.0
        $region40: #{tpu_custom_call.1} parent=27 // pred_fallthru
          _
        %v228 = vld [vmem:[%s183] sm:$0xff]
        %v229 = vld [vmem:[%s183 + $0x8] sm:$0xff]
        %v230 = vld [vmem:[%s183 + $0x10] sm:$0xff]
        %v231 = vld [vmem:[%s183 + $0x18] sm:$0xff]
        %v232 = vmax.f32 %v228, %v230
        %v233 = vrot.slane %v232, 4
        %v234 = vmax.f32 %v232, %v233
        %v235 = vrot.slane %v234, 2
        %v236 = vmax.f32 %v234, %v235
        %v237 = vrot.slane %v236, 1
        %v238 = vmax.f32 %v236, %v237
        %v239 = vmax.f32 %v229, %v231
        %v240 = vrot.slane %v239, 4
        %v241 = vmax.f32 %v239, %v240
        %v242 = vrot.slane %v241, 2
        %v243 = vmax.f32 %v241, %v242
        %v244 = vrot.slane %v243, 1
        %v245 = vmax.f32 %v243, %v244
        %v246 = vsub.f32 %v228, %v238
        %v247 = vsub.f32 %v229, %v245
        %v248 = vsub.f32 %v230, %v238
        %v249 = vsub.f32 %v231, %v245
        %v250 = vmul.f32 %v246, 1.442695
        %v251 = vpow.pop %v250
        %v252 = vmul.f32 %v247, 1.442695
        %v253 = vpow.pop %v252
        %v254 = vmul.f32 %v248, 1.442695
        %v255 = vpow.pop %v254
        %v256 = vmul.f32 %v249, 1.442695
        %v257 = vpow.pop %v256
        %v258 = vadd.f32 %v251, %v255
        %v259 = vrot.slane %v258, 4
        %v260 = vadd.f32 %v258, %v259
        %v261 = vrot.slane %v260, 2
        %v262 = vadd.f32 %v260, %v261
        %v263 = vrot.slane %v262, 1
        %v264 = vadd.f32 %v262, %v263
        %v265 = vadd.f32 %v253, %v257
        %v266 = vrot.slane %v265, 4
        %v267 = vadd.f32 %v265, %v266
        %v268 = vrot.slane %v267, 2
        %v269 = vadd.f32 %v267, %v268
        %v270 = vrot.slane %v269, 1
        %v271 = vadd.f32 %v269, %v270
        %v272 = vrcp.pop %v264
        %v273 = vrcp.pop %v271
        %v274 = vmul.f32 %v251, %v272
        %v275 = vmul.f32 %v253, %v273
        %v276 = vmul.f32 %v255, %v272
        %v277 = vmul.f32 %v257, %v273
        %v278 = vlaneseq
        %v279 = vshrl.u32 %v278, 7
        %v280 = vadd.s32 %v279, 8
        %v281 = vlaneseq
        %v282 = vand.u32 %v281, 127
        %v283 = vadd.s32 %v282, 128
        %s284 = smul.u32 %s27, 16
        %v285 = vstv %s284
        %v286 = vsub.s32 %v279, %v285
        %v287 = vsub.s32 %v280, %v285
        %v288 = vmul.u32 %v286, 16
        %v289 = vmul.u32 %v287, 16
        %v290 = vsub.s32 %v282, %v288
        %v291 = vsub.s32 %v283, %v288
        %v292 = vsub.s32 %v282, %v289
        %v293 = vsub.s32 %v283, %v289
        %vm294 = vcmp.ge.s32.totalorder %v290, 0
        %vm295 = vcmp.ge.s32.totalorder %v291, 0
        %vm296 = vcmp.ge.s32.totalorder %v292, 0
        %vm297 = vcmp.ge.s32.totalorder %v293, 0
        %vm298 = vcmp.lt.s32.totalorder %v290, 16
        %vm299 = vcmp.lt.s32.totalorder %v291, 16
        %vm300 = vcmp.lt.s32.totalorder %v292, 16
        %vm301 = vcmp.lt.s32.totalorder %v293, 16
        %vm302 = vmand %vm294, %vm298
        %vm303 = vmand %vm295, %vm299
        %vm304 = vmand %vm296, %vm300
        %vm305 = vmand %vm297, %vm301
        %v306 = vsel %vm302, 1.0, 0.0
        %v307 = vsel %vm303, 1.0, 0.0
        %v308 = vsel %vm304, 1.0, 0.0
        %v309 = vsel %vm305, 1.0, 0.0
        %v310 = vld [vmem:[%s192] sm:$0xff]
        %v311 = vld [vmem:[%s192 + $0x8] sm:$0xff]
        %v312 = vmul.u32 %v282, 16
        %v313 = vadd.s32 %v310, %v312
        %v314 = vadd.s32 %v311, %v312
        %v315 = vand.u32 %v313, 255
        %v316 = vand.u32 %v314, 255
        %v317 = vcvt.s32.f32 %v315
        %v318 = vcvt.s32.f32 %v316
        %vm319 = vcmask 130048
        %v321 = vsel %vm319, %v317, 0
        %v324 = vsel %vm319, %v318, 0
        %326 = vmatprep.subr.mxu0 0.0
        %327 = vmatpush1.msra.mxu0 0.0
        %328 = vmatprep.subr.mxu0 0.0
        %329 = vmatpush1.msra.mxu0 0.0
        %330 = vmatprep.subr.mxu0 0.0
        %331 = vmatpush1.msra.mxu0 0.0
        %332 = vmatprep.subr.mxu0 0.0
        %333 = vmatpush1.msra.mxu0 0.0
        %334 = vmatprep.subr.mxu0 0.0
        %335 = vmatpush1.msra.mxu0 0.0
        %336 = vmatprep.subr.mxu0 0.0
        %337 = vmatpush1.msra.mxu0 0.0
        %338 = vmatprep.subr.mxu0 0.0
        %339 = vmatpush1.msra.mxu0 0.0
        %340 = vmatprep.subr.mxu0 0.0
        %341 = vmatpush1.msra.mxu0 0.0
        %342 = vmatprep.subr.mxu0 0.0
        %343 = vmatpush1.msra.mxu0 0.0
        %344 = vmatprep.subr.mxu0 0.0
        %345 = vmatpush1.msra.mxu0 0.0
        %346 = vmatprep.subr.mxu0 0.0
        %347 = vmatpush1.msra.mxu0 0.0
        %348 = vmatprep.subr.mxu0 0.0
        %349 = vmatpush1.msra.mxu0 0.0
        %350 = vmatprep.subr.mxu0 0.0
        %351 = vmatpush1.msra.mxu0 0.0
        %352 = vmatprep.subr.mxu0 0.0
        %353 = vmatpush1.msra.mxu0 0.0
        %354 = vmatprep.subr.mxu0 %v309
        %355 = vmatpush1.msra.mxu0 %v308
        %356 = vmatprep.subr.mxu0 %v307
        %357 = vmatpush1.msra.mxu0 %v306
        %358 = vmatprep.subr.mxu0 0.0
        %359 = vmatpush2.msra.mxu0 0.0
        %360 = vmatprep.subr.mxu0 0.0
        %361 = vmatpush2.msra.mxu0 0.0
        %362 = vmatprep.subr.mxu0 0.0
        %363 = vmatpush2.msra.mxu0 0.0
        %364 = vmatprep.subr.mxu0 0.0
        %365 = vmatpush2.msra.mxu0 0.0
        %366 = vmatprep.subr.mxu0 0.0
        %367 = vmatpush2.msra.mxu0 0.0
        %368 = vmatprep.subr.mxu0 0.0
        %369 = vmatpush2.msra.mxu0 0.0
        %370 = vmatprep.subr.mxu0 0.0
        %371 = vmatpush2.msra.mxu0 0.0
        %372 = vmatprep.subr.mxu0 0.0
        %373 = vmatpush2.msra.mxu0 0.0
        %374 = vmatprep.subr.mxu0 0.0
        %375 = vmatpush2.msra.mxu0 0.0
        %376 = vmatprep.subr.mxu0 0.0
        %377 = vmatpush2.msra.mxu0 0.0
        %378 = vmatprep.subr.mxu0 0.0
        %379 = vmatpush2.msra.mxu0 0.0
        %380 = vmatprep.subr.mxu0 0.0
        %381 = vmatpush2.msra.mxu0 0.0
        %382 = vmatprep.subr.mxu0 0.0
        %383 = vmatpush2.msra.mxu0 0.0
        %384 = vmatprep.subr.mxu0 0.0
        %385 = vmatpush2.msra.mxu0 0.0
        %386 = vmatprep.subr.mxu0 0.0
        %387 = vmatpush2.msra.mxu0 0.0
        %388 = vmatprep.subr.mxu0 0.0
        %389 = vmatpush2.msra.mxu0 0.0
        %390 = vmatprep.mubr.f32.mxu0 0.0
        %391 = vmatmul.mubr.f32.gmra.mxu0 %v321
        %v392 = vpop.f32.mrf.mxu0
        %v393 = vadd.f32 0.0, %v392
        %v394 = vpop.f32.mrf.mxu0
        %v395 = vadd.f32 0.0, %v394
        %396 = vmatprep.mubr.f32.mxu0 0.0
        %397 = vmatmul.mubr.f32.gmra.mxu0 %v324
        %v398 = vpop.f32.mrf.mxu0
        %v399 = vadd.f32 0.0, %v398
        %v400 = vpop.f32.mrf.mxu0
        %v401 = vadd.f32 0.0, %v400
        %402 = vdwg.mxu0
        %s403 = smul.u32 %s27, 256
        %v404 = vstv %s403
        %v405 = vadd.s32 %v282, %v404
        %v406 = vadd.s32 %v283, %v404
        %v407 = vcvt.s32.f32 %v405
        %v408 = vcvt.s32.f32 %v406
        %vm409 = vcmp.eq.f32.partialorder %v393, %v407
        %vm410 = vcmp.eq.f32.partialorder %v395, %v408
        %vm411 = vcmp.eq.f32.partialorder %v399, %v407
        %vm412 = vcmp.eq.f32.partialorder %v401, %v408
        %v413 = vld [vmem:[#allocation2] sm:$0xff]
        %v414 = vld [vmem:[#allocation2 + $0x8] sm:$0xff]
        %v415 = vsel %vm409, %v274, 0.0
        %v416 = vsel %vm410, %v275, 0.0
        %v417 = vsel %vm411, %v276, 0.0
        %v418 = vsel %vm412, %v277, 0.0
        %v419 = vadd.f32 %v415, %v416
        %420 = vadd.xlane.f32.xlu0 %v419
        %v421 = vpop.xlane.xlu0 %420
        %v422 = vadd.f32 %v417, %v418
        %423 = vadd.xlane.f32.xlu0 %v422
        %v424 = vpop.xlane.xlu0 %423
        %v425 = vadd.f32 %v413, %v421
        %v426 = vadd.f32 %v414, %v424
        %vm427 = vcmask 7168
        %428 = vst.msk [vmem:[#allocation2] sm:$0xff] %vm427, %v425
        %429 = vst.msk [vmem:[#allocation2 + $0x8] sm:$0xff] %vm427, %v426
        %v430 = vld [vmem:[#allocation3] sm:$0xff]
        %v431 = vld [vmem:[#allocation3 + $0x8] sm:$0xff]
        %v432 = vadd.f32 %v274, %v275
        %433 = vadd.xlane.f32.xlu0 %v432
        %v434 = vpop.xlane.xlu0 %433
        %v435 = vadd.f32 %v276, %v277
        %436 = vadd.xlane.f32.xlu0 %v435
        %v437 = vpop.xlane.xlu0 %436
        %v438 = vadd.f32 %v430, %v434
        %v439 = vadd.f32 %v431, %v437
        %440 = vst.msk [vmem:[#allocation3] sm:$0xff] %vm427, %v438
        %441 = vst.msk [vmem:[#allocation3 + $0x8] sm:$0xff] %vm427, %v439
        // Predicated region
        $region41: #{tpu_custom_call.1} parent=27 // pred_check
          %p442 = pneg %p219
        $region42: #{tpu_custom_call.1} parent=27 // pred_check_branch
          %444 = sbr.rel (%p442) target = $region44
        $region43: #{tpu_custom_call.1} parent=27 // pred_region
          %v445 = vld [vmem:[#allocation2] sm:$0xff]
          %v446 = vld [vmem:[#allocation2 + $0x8] sm:$0xff]
          %v447 = vmul.f32 %v445, 2.0
          %v448 = vmul.f32 %v446, 2.0
          %v449 = vadd.f32 %v447, 1.0
          %v450 = vadd.f32 %v448, 1.0
          %v451 = vld [vmem:[#allocation3] sm:$0xff]
          %v452 = vld [vmem:[#allocation3 + $0x8] sm:$0xff]
          %v453 = vadd.f32 %v451, 16.0
          %v454 = vadd.f32 %v452, 16.0
          %v455 = vadd.f32 %v453, 1.0
          %v456 = vadd.f32 %v454, 1.0
          %v457 = vrcp.pop %v455
          %v458 = vrcp.pop %v456
          %v459 = vmul.f32 %v449, %v457
          %v460 = vmul.f32 %v450, %v458
          %v461 = vsel %vm427, %v459, 0.0
          %v462 = vsel %vm427, %v460, 0.0
          %v463 = vadd.f32 %v461, %v462
          %v464 = vrot.slane %v463, 4
          %v465 = vadd.f32 %v463, %v464
          %v466 = vrot.slane %v465, 2
          %v467 = vadd.f32 %v465, %v466
          %v468 = vrot.slane %v467, 1
          %v469 = vadd.f32 %v467, %v468
          %v470 = vmul.f32 %v469, 0.0625
          %v471 = vsub.f32 1.0, %v470
          %473 = vset.pattern.permute.xlu0 0
          %474 = vperm.xlu0 %473, %v471
          %v475 = vpop.permute.xlu0 %474
          %477 = vst [vmem:[%s217] sm:$0xff] %v475
        $region44: #{tpu_custom_call.1} parent=27 // pred_fallthru
          _
        %s478 = sand.u32 %s96, 1
        %s479 = scalar_lea.sflag [#allocation6], %s478
        %s480 = sand.u32 %s96, 1
        %s481 = smul.addr %s480, 8
        %s482 = scalar_lea.vmem [#allocation9], %s481
        // Predicated region
        $region45: #{tpu_custom_call.1} parent=27 // pred_check
          %p483 = pneg %p106
        $region46: #{tpu_custom_call.1} parent=27 // pred_check_branch
          %485 = sbr.rel (%p483) target = $region48
        $region47: #{tpu_custom_call.1} parent=27 // pred_region
          %s487 = ssub.s32 128, 128
          %488 = vsyncadd %s479, %s487
          %s489 = smul.addr %s26, 128
          %s490 = scalar_lea.hbm %s2, %s489
          %s492 = sshll.u32 %s482, 4
          %s493 = int_to_ptr.vmem [resolvable:$true] %s492
          %495 = dma.vmem_to_hbm [thread:$0]  %s493, 128, %s490, %s479
        $region48: #{tpu_custom_call.1} parent=27 // pred_fallthru
          _
      $region28: #{tpu_custom_call.1} parent=5 // pred_fallthru
        _
      %p496 = scmp.le.s32.totalorder 2, %s17
      // Predicated region
      $region49: #{tpu_custom_call.1} parent=5 // pred_check
        %p497 = pneg %p496
      $region50: #{tpu_custom_call.1} parent=5 // pred_check_branch
        %499 = sbr.rel (%p497) target = $region52
      $region51: #{tpu_custom_call.1} parent=5 // pred_region
        %s500 = ssub.s32 %s17, 2
        // Predicated region
        $region53: #{tpu_custom_call.1} parent=51 // pred_check
          %p501 = pneg %p112
        $region54: #{tpu_custom_call.1} parent=51 // pred_check_branch
          %503 = sbr.rel (%p501) target = $region56
        $region55: #{tpu_custom_call.1} parent=51 // pred_region
          %s504 = sand.u32 %s97, 1
          %s505 = scalar_lea.sflag [#allocation6], %s504
          %s506 = sand.u32 %s97, 1
          %s507 = smul.addr %s506, 8
          %s508 = scalar_lea.vmem [#allocation9], %s507
          %509 = dma.done %s505, 128
        $region56: #{tpu_custom_call.1} parent=51 // pred_fallthru
          _
      $region52: #{tpu_custom_call.1} parent=5 // pred_fallthru
        _
    $region6: #{tpu_custom_call.1} parent=1 // loop_footer
      %s21 = sadd.s32 1, %s17
    $region7: #{tpu_custom_call.1} parent=1 // loop_footer_branch
      %16 = sbr.rel target = $region3
    $region8: #{tpu_custom_call.1} parent=1 // loop_exit
      _
    %510 = vsyncpa [#allocation5], 1
    %s511 = scalar_lea.sflag [#allocation5], 1
    %512 = vsyncpa %s511, 1
    %513 = vsyncpa [#allocation8], 1
    %s514 = scalar_lea.sflag [#allocation8], 1
    %515 = vsyncpa %s514, 1
    %516 = vsyncpa [#allocation6], 1
    %s517 = scalar_lea.sflag [#allocation6], 1
    %518 = vsyncpa %s517, 1

</llo_original>
